<compile_context>
chip_gen: v6e
topology: v6e:2x2x1
jax: 0.10.0
libtpu: 0.0.40
codegen_flags: <defaults>
</compile_context>

<pallas_src>
import functools

import jax
import jax.numpy as jnp
from jax.experimental import pallas as pl
from jax.experimental.pallas import tpu as pltpu

LANE = 128


def _rup(x, m):
    return ((x + m - 1) // m) * m


# ----------------------------------------------------------------------------
# Kernel
# ----------------------------------------------------------------------------
def _make_critic_kernel(SP, A, AP, lane, off_w1, off_w2s, off_w2a, off_w3, off_w4):
    def kernel(state_ref, action_ref, w_ref, b_ref, out_ref):
        w_dtype = w_ref.dtype

        b = b_ref[...]                       # (8, lane) f32, VMEM-resident
        b1 = b[0:1, :]
        b2 = b[1:2, :]
        b3 = b[2:3, :]
        b4 = b[3:4, 0:1]                     # (1, 1)

        x = state_ref[...]                   # (TB, SP)   compute dtype
        act = action_ref[...].astype(jnp.float32)   # (TB, A)

        # --- fcs1 + ReLU (output width padded to `lane`; padded cols stay 0) --
        xs = jnp.dot(x, w_ref[off_w1:off_w1 + SP, :],
                     preferred_element_type=jnp.float32) + b1
        xs = jnp.maximum(xs, 0.0)            # (TB, lane) f32

        # --- fc2 over concat(xs, action):
        #     state branch on the MXU, action branch as a rank-A VPU update. ---
        h2 = jnp.dot(xs.astype(w_dtype), w_ref[off_w2s:off_w2s + lane, :],
                     preferred_element_type=jnp.float32) + b2
        w2a = w_ref[off_w2a:off_w2a + AP, :].astype(jnp.float32)  # aligned load
        for k in range(A):                   # static unroll (A is tiny)
            h2 = h2 + act[:, k:k + 1] * w2a[k:k + 1, :]
        h2 = jnp.maximum(h2, 0.0)            # (TB, lane)

        # --- fc3 + ReLU -------------------------------------------------------
        h3 = jnp.dot(h2.astype(w_dtype), w_ref[off_w3:off_w3 + lane, :],
                     preferred_element_type=jnp.float32) + b3
        h3 = jnp.maximum(h3, 0.0)            # (TB, lane)

        # --- fc4 head: VPU multiply + lane reduce (avoid an N=1 MXU matmul) ---
        w4row = w_ref[off_w4:off_w4 + 8, :].astype(jnp.float32)[0:1, :]  # (1, lane)
        q = jnp.sum(h3 * w4row, axis=-1, keepdims=True) + b4             # (TB, 1)
        out_ref[...] = q.astype(out_ref.dtype)

    return kernel


# ----------------------------------------------------------------------------
# Parameter init (logical, PyTorch-equivalent layout) and packing
# ----------------------------------------------------------------------------
def init_params(key, state_size=24, action_size=2,
                fcs1_units=64, fc2_units=128, fc3_units=64):
    """Logical params: weights stored as [in, out] (i.e. nn.Linear weight^T)."""
    ks = jax.random.split(key, 8)

    def unif(k, shape, lim):
        return jax.random.uniform(k, shape, jnp.float32, -lim, lim)

    # hidden_init in the reference uses weight.size()[0] == out_features.
    lim1 = 1.0 / float(jnp.sqrt(jnp.float32(fcs1_units)))
    lim2 = 1.0 / float(jnp.sqrt(jnp.float32(fc2_units)))
    lim3 = 1.0 / float(jnp.sqrt(jnp.float32(fc3_units)))

    w1 = unif(ks[0], (state_size, fcs1_units), lim1)
    b1 = unif(ks[1], (fcs1_units,), 1.0 / float(jnp.sqrt(jnp.float32(state_size))))

    w2 = unif(ks[2], (fcs1_units + action_size, fc2_units), lim2)
    b2 = unif(ks[3], (fc2_units,),
              1.0 / float(jnp.sqrt(jnp.float32(fcs1_units + action_size))))

    w3 = unif(ks[4], (fc2_units, fc3_units), lim3)
    b3 = unif(ks[5], (fc3_units,), 1.0 / float(jnp.sqrt(jnp.float32(fc2_units))))

    w4 = unif(ks[6], (fc3_units, 1), 0.003)
    b4 = unif(ks[7], (1,), 1.0 / float(jnp.sqrt(jnp.float32(fc3_units))))

    return (w1, b1, w2, b2, w3, b3, w4, b4)


def pack_params(logical, *, state_size=24, action_size=2,
                fcs1_units=64, fc2_units=128, fc3_units=64,
                compute_dtype=jnp.float32, lane=LANE):
    """Pack all weights into one [rows, lane] slab and all biases into [8, lane]."""
    w1, b1, w2, b2, w3, b3, w4, b4 = logical
    S, A, H1, H2, H3 = state_size, action_size, fcs1_units, fc2_units, fc3_units
    assert max(H1, H2, H3) <= lane, "hidden widths must be <= 128 for this packing"

    SP = _rup(S, 8)
    AP = _rup(A, 8)

    def pad2(x, rows, cols):
        return jnp.pad(x, ((0, rows - x.shape[0]), (0, cols - x.shape[1])))

    w2s = w2[:H1]        # state-branch part of fc2 weight  [H1, H2]
    w2a = w2[H1:]        # action-branch part of fc2 weight [A,  H2]

    segs = [
        pad2(w1, SP, lane),        # rows: SP
        pad2(w2s, lane, lane),     # rows: lane (K padded to match xs width)
        pad2(w2a, AP, lane),       # rows: AP
        pad2(w3, lane, lane),      # rows: lane
        pad2(w4.T, 8, lane),       # rows: 8   (row 0 = w4^T)
    ]
    w_slab = jnp.concatenate(segs, axis=0).astype(compute_dtype)

    r = 0
    off_w1 = r;  r += SP
    off_w2s = r; r += lane
    off_w2a = r; r += AP
    off_w3 = r;  r += lane
    off_w4 = r;  r += 8

    b_slab = jnp.zeros((8, lane), jnp.float32)
    b_slab = b_slab.at[0, :H1].set(b1)
    b_slab = b_slab.at[1, :H2].set(b2)
    b_slab = b_slab.at[2, :H3].set(b3)
    b_slab = b_slab.at[3, 0].set(b4[0])

    meta = dict(S=S, SP=SP, A=A, AP=AP, lane=lane,
                off_w1=off_w1, off_w2s=off_w2s, off_w2a=off_w2a,
                off_w3=off_w3, off_w4=off_w4)
    return w_slab, b_slab, meta


# ----------------------------------------------------------------------------
# Forward wrapper
# ----------------------------------------------------------------------------
def critic_forward(state, action, packed, *, tile_b=256, interpret=False):
    """state: [B, state_size], action: [B, action_size] -> [B, 1] f32."""
    w_slab, b_slab, m = packed
    S, SP, A, AP, lane = m["S"], m["SP"], m["A"], m["AP"], m["lane"]

    B = state.shape[0]
    state = state.astype(w_slab.dtype)
    action = action.astype(jnp.float32)

    # Pad state feature dim to the 8-aligned K used by the packed w1 segment.
    if SP != S:
        state = jnp.pad(state, ((0, 0), (0, SP - S)))

    # Batch tiling: single tile for small B, else `tile_b`-row tiles.
    if B <= tile_b:
        TB = _rup(max(B, 8), 8)
    else:
        TB = _rup(tile_b, 8)
    B_pad = _rup(B, TB)
    if B_pad != B:
        state = jnp.pad(state, ((0, B_pad - B), (0, 0)))
        action = jnp.pad(action, ((0, B_pad - B), (0, 0)))

    grid = (B_pad // TB,)
    n_rows = w_slab.shape[0]

    kernel = _make_critic_kernel(SP, A, AP, lane, m["off_w1"], m["off_w2s"],
                                 m["off_w2a"], m["off_w3"], m["off_w4"])

    flops = int(2 * B_pad * (SP * lane + lane * lane + A * lane + lane * lane + lane))
    bytes_accessed = int(
        state.size * state.dtype.itemsize
        + action.size * action.dtype.itemsize
        + w_slab.size * w_slab.dtype.itemsize
        + b_slab.size * b_slab.dtype.itemsize
        + B_pad * 4)

    out = pl.pallas_call(
        kernel,
        out_shape=jax.ShapeDtypeStruct((B_pad, 1), jnp.float32),
        grid_spec=pltpu.PrefetchScalarGridSpec(
            num_scalar_prefetch=0,
            grid=grid,
            in_specs=[
                pl.BlockSpec((TB, SP), lambda i: (i, 0)),        # state tile
                pl.BlockSpec((TB, A), lambda i: (i, 0)),         # action tile
                pl.BlockSpec((n_rows, lane), lambda i: (0, 0)),  # resident weights
                pl.BlockSpec((8, lane), lambda i: (0, 0)),       # resident biases
            ],
            out_specs=pl.BlockSpec((TB, 1), lambda i: (i, 0)),
        ),
        compiler_params=pltpu.CompilerParams(
            dimension_semantics=("parallel",)),
        cost_estimate=pl.CostEstimate(flops=flops, transcendentals=0,
                                      bytes_accessed=bytes_accessed),
        interpret=interpret,
    )(state, action, w_slab, b_slab)

    return out[:B]


# ----------------------------------------------------------------------------
# Plain-JAX reference (mirrors the PyTorch module exactly)
# ----------------------------------------------------------------------------
def critic_reference(state, action, logical):
    w1, b1, w2, b2, w3, b3, w4, b4 = logical
    xs = jnp.maximum(state @ w1 + b1, 0.0)
    x = jnp.concatenate([xs, action], axis=1)
    h2 = jnp.maximum(x @ w2 + b2, 0.0)
    h3 = jnp.maximum(h2 @ w3 + b3, 0.0)
    return h3 @ w4 + b4


if __name__ == "__main__":
    key = jax.random.PRNGKey(0)
    k_params, k_state, k_action = jax.random.split(key, 3)

    STATE, ACTION = 24, 2
    logical = init_params(k_params, state_size=STATE, action_size=ACTION)
    packed = pack_params(logical, state_size=STATE, action_size=ACTION)

    # --- small batch (single grid step) ------------------------------------
    B = 8
    state = jax.random.normal(k_state, (B, STATE), jnp.float32)
    action = jax.random.normal(k_action, (B, ACTION), jnp.float32)

    q = jax.block_until_ready(critic_forward(state, action, packed))
    q_ref = critic_reference(state, action, logical)
    assert q.shape == (B, 1)
    assert jnp.allclose(q, q_ref, atol=2e-5, rtol=1e-4), "mismatch vs reference (B=8)"

    # --- multi-tile batch (exercises grid, padding, resident weights) ------
    B2 = 40
    k_s2, k_a2 = jax.random.split(jax.random.PRNGKey(1))
    state2 = jax.random.normal(k_s2, (B2, STATE), jnp.float32)
    action2 = jax.random.normal(k_a2, (B2, ACTION), jnp.float32)

    q2 = jax.block_until_ready(critic_forward(state2, action2, packed, tile_b=16))
    q2_ref = critic_reference(state2, action2, logical)
    assert q2.shape == (B2, 1)
    assert jnp.allclose(q2, q2_ref, atol=2e-5, rtol=1e-4), "mismatch vs reference (B=40)"

    print("KERNEL_OK")
</pallas_src>

<mosaic_0001>
module attributes {stable_mosaic.version = 11 : i64} {
  func.func @kernel(%arg0: i32, %arg1: memref<8x24xf32, #tpu.memory_space<vmem>>, %arg2: memref<8x2xf32, #tpu.memory_space<vmem>>, %arg3: memref<296x128xf32, #tpu.memory_space<vmem>>, %arg4: memref<8x128xf32, #tpu.memory_space<vmem>>, %arg5: memref<8x1xf32, #tpu.memory_space<vmem>>) attributes {dimension_semantics = [#tpu.dimension_semantics<parallel>], iteration_bounds = array<i64: 1>, scalar_prefetch = 0 : i64, scratch_operands = 0 : i64, tpu.core_type = #tpu.core_type<tc>, window_params = [{transform_indices = @transform_0, window_bounds = array<i64: 8, 24>}, {transform_indices = @transform_1, window_bounds = array<i64: 8, 2>}, {pipeline_mode = #tpu.pipeline_mode<synchronous>, transform_indices = @transform_2, window_bounds = array<i64: 296, 128>}, {pipeline_mode = #tpu.pipeline_mode<synchronous>, transform_indices = @transform_3, window_bounds = array<i64: 8, 128>}, {transform_indices = @transform_4, window_bounds = array<i64: 8, 1>}]} {
    %c0 = arith.constant 0 : index
    %c0_0 = arith.constant 0 : index
    %0 = vector.load %arg4[%c0, %c0_0] : memref<8x128xf32, #tpu.memory_space<vmem>>, vector<8x128xf32>
    %1 = vector.extract_strided_slice %0 {offsets = [0, 0], sizes = [1, 128], strides = [1, 1]} : vector<8x128xf32> to vector<1x128xf32>
    %2 = vector.extract_strided_slice %0 {offsets = [1, 0], sizes = [1, 128], strides = [1, 1]} : vector<8x128xf32> to vector<1x128xf32>
    %3 = vector.extract_strided_slice %0 {offsets = [2, 0], sizes = [1, 128], strides = [1, 1]} : vector<8x128xf32> to vector<1x128xf32>
    %4 = vector.extract_strided_slice %0 {offsets = [3, 0], sizes = [1, 1], strides = [1, 1]} : vector<8x128xf32> to vector<1x1xf32>
    %c0_1 = arith.constant 0 : index
    %c0_2 = arith.constant 0 : index
    %5 = vector.load %arg1[%c0_1, %c0_2] : memref<8x24xf32, #tpu.memory_space<vmem>>, vector<8x24xf32>
    %c0_3 = arith.constant 0 : index
    %c0_4 = arith.constant 0 : index
    %6 = vector.load %arg2[%c0_3, %c0_4] : memref<8x2xf32, #tpu.memory_space<vmem>>, vector<8x2xf32>
    %c0_5 = arith.constant 0 : index
    %c0_6 = arith.constant 0 : index
    %7 = vector.load %arg3[%c0_5, %c0_6] : memref<296x128xf32, #tpu.memory_space<vmem>>, vector<24x128xf32>
    %cst = arith.constant dense<0.000000e+00> : vector<8x128xf32>
    %8 = tpu.matmul %5, %7, %cst {dimension_numbers = #tpu.dot_dimension_numbers<[1], [0], [0], [1], [0, 0, 1, 1], [], []>} : vector<8x24xf32>, vector<24x128xf32>, vector<8x128xf32> -> vector<8x128xf32>
    %9 = vector.broadcast %1 : vector<1x128xf32> to vector<8x128xf32>
    %10 = arith.addf %8, %9 : vector<8x128xf32>
    %cst_7 = arith.constant 0.000000e+00 : f32
    %11 = vector.broadcast %cst_7 : f32 to vector<8x128xf32>
    %12 = arith.maximumf %10, %11 : vector<8x128xf32>
    %c24 = arith.constant 24 : index
    %c0_8 = arith.constant 0 : index
    %13 = vector.load %arg3[%c24, %c0_8] : memref<296x128xf32, #tpu.memory_space<vmem>>, vector<128x128xf32>
    %cst_9 = arith.constant dense<0.000000e+00> : vector<8x128xf32>
    %14 = tpu.matmul %12, %13, %cst_9 {dimension_numbers = #tpu.dot_dimension_numbers<[1], [0], [0], [1], [0, 0, 1, 1], [], []>} : vector<8x128xf32>, vector<128x128xf32>, vector<8x128xf32> -> vector<8x128xf32>
    %15 = vector.broadcast %2 : vector<1x128xf32> to vector<8x128xf32>
    %16 = arith.addf %14, %15 : vector<8x128xf32>
    %c152 = arith.constant 152 : index
    %c0_10 = arith.constant 0 : index
    %17 = vector.load %arg3[%c152, %c0_10] : memref<296x128xf32, #tpu.memory_space<vmem>>, vector<8x128xf32>
    %18 = vector.extract_strided_slice %6 {offsets = [0, 0], sizes = [8, 1], strides = [1, 1]} : vector<8x2xf32> to vector<8x1xf32>
    %19 = vector.extract_strided_slice %17 {offsets = [0, 0], sizes = [1, 128], strides = [1, 1]} : vector<8x128xf32> to vector<1x128xf32>
    %20 = vector.broadcast %18 : vector<8x1xf32> to vector<8x128xf32>
    %21 = vector.broadcast %19 : vector<1x128xf32> to vector<8x128xf32>
    %22 = arith.mulf %20, %21 : vector<8x128xf32>
    %23 = arith.addf %16, %22 : vector<8x128xf32>
    %24 = vector.extract_strided_slice %6 {offsets = [0, 1], sizes = [8, 1], strides = [1, 1]} : vector<8x2xf32> to vector<8x1xf32>
    %25 = vector.extract_strided_slice %17 {offsets = [1, 0], sizes = [1, 128], strides = [1, 1]} : vector<8x128xf32> to vector<1x128xf32>
    %26 = vector.broadcast %24 : vector<8x1xf32> to vector<8x128xf32>
    %27 = vector.broadcast %25 : vector<1x128xf32> to vector<8x128xf32>
    %28 = arith.mulf %26, %27 : vector<8x128xf32>
    %29 = arith.addf %23, %28 : vector<8x128xf32>
    %cst_11 = arith.constant 0.000000e+00 : f32
    %30 = vector.broadcast %cst_11 : f32 to vector<8x128xf32>
    %31 = arith.maximumf %29, %30 : vector<8x128xf32>
    %c160 = arith.constant 160 : index
    %c0_12 = arith.constant 0 : index
    %32 = vector.load %arg3[%c160, %c0_12] : memref<296x128xf32, #tpu.memory_space<vmem>>, vector<128x128xf32>
    %cst_13 = arith.constant dense<0.000000e+00> : vector<8x128xf32>
    %33 = tpu.matmul %31, %32, %cst_13 {dimension_numbers = #tpu.dot_dimension_numbers<[1], [0], [0], [1], [0, 0, 1, 1], [], []>} : vector<8x128xf32>, vector<128x128xf32>, vector<8x128xf32> -> vector<8x128xf32>
    %34 = vector.broadcast %3 : vector<1x128xf32> to vector<8x128xf32>
    %35 = arith.addf %33, %34 : vector<8x128xf32>
    %cst_14 = arith.constant 0.000000e+00 : f32
    %36 = vector.broadcast %cst_14 : f32 to vector<8x128xf32>
    %37 = arith.maximumf %35, %36 : vector<8x128xf32>
    %c288 = arith.constant 288 : index
    %c0_15 = arith.constant 0 : index
    %38 = vector.load %arg3[%c288, %c0_15] : memref<296x128xf32, #tpu.memory_space<vmem>>, vector<8x128xf32>
    %39 = vector.extract_strided_slice %38 {offsets = [0, 0], sizes = [1, 128], strides = [1, 1]} : vector<8x128xf32> to vector<1x128xf32>
    %40 = vector.broadcast %39 : vector<1x128xf32> to vector<8x128xf32>
    %41 = arith.mulf %37, %40 : vector<8x128xf32>
    %cst_16 = arith.constant dense<0.000000e+00> : vector<8xf32>
    %42 = vector.multi_reduction <add>, %41, %cst_16 [1] : vector<8x128xf32> to vector<8xf32>
    %43 = vector.shape_cast %42 : vector<8xf32> to vector<8x1xf32>
    %44 = vector.broadcast %4 : vector<1x1xf32> to vector<8x1xf32>
    %45 = arith.addf %43, %44 : vector<8x1xf32>
    %c0_17 = arith.constant 0 : index
    %c0_18 = arith.constant 0 : index
    %46 = vector.load %arg5[%c0_17, %c0_18] : memref<8x1xf32, #tpu.memory_space<vmem>>, vector<8x1xf32>
    tpu.vector_store %arg5[%c0_17, %c0_18], %45 {strides = array<i32>} : memref<8x1xf32, #tpu.memory_space<vmem>>, vector<8x1xf32>,
    return
  }
  func.func @transform_0(%arg0: i32) -> (i32, i32) {
    %c0_i32 = arith.constant 0 : i32
    %c0_i32_0 = arith.constant 0 : i32
    return %arg0, %c0_i32 : i32, i32
  }
  func.func @transform_1(%arg0: i32) -> (i32, i32) {
    %c0_i32 = arith.constant 0 : i32
    %c0_i32_0 = arith.constant 0 : i32
    return %arg0, %c0_i32 : i32, i32
  }
  func.func @transform_2(%arg0: i32) -> (i32, i32) {
    %c0_i32 = arith.constant 0 : i32
    %c0_i32_0 = arith.constant 0 : i32
    %c0_i32_1 = arith.constant 0 : i32
    return %c0_i32, %c0_i32_0 : i32, i32
  }
  func.func @transform_3(%arg0: i32) -> (i32, i32) {
    %c0_i32 = arith.constant 0 : i32
    %c0_i32_0 = arith.constant 0 : i32
    %c0_i32_1 = arith.constant 0 : i32
    return %c0_i32, %c0_i32_0 : i32, i32
  }
  func.func @transform_4(%arg0: i32) -> (i32, i32) {
    %c0_i32 = arith.constant 0 : i32
    %c0_i32_0 = arith.constant 0 : i32
    return %arg0, %c0_i32 : i32, i32
  }
}

</mosaic_0001>

<llo_original>
// kernel: tpu_custom_call.1
$region0: #{tpu_custom_call.1}
  #allocation0 [shape = 'u32[]', space=smem, size = 0x4, offset = 0x4, fixed_abs, tag = 'smem constant byte address 0x4 - core index']
  #allocation1 [shape = 'u32[144,128]{1,0:T(1,128)}', space=vmem, size = 0x12000, scoped, tag = 'internal scratch']
  %s0 = inlined_call_operand.vmem [shape: f32[8,24], index: 0, kind: input, shape index: {}]
  %s1 = inlined_call_operand.vmem [shape: f32[8,2], index: 1, kind: input, shape index: {}]
  %s2 = inlined_call_operand.hbm [shape: f32[296,128], index: 2, kind: input, shape index: {}]
  %s3 = inlined_call_operand.hbm [shape: f32[8,128], index: 3, kind: input, shape index: {}]
  %s4 = inlined_call_operand.vmem [shape: f32[8,1], index: 4, kind: output, shape index: {}]
  %s5 = sld [smem:[#allocation0]]
  $region34: #{tpu_custom_call.1} parent=0
    _
  %s7 = ssub.s32 1, %s5
  %s8 = scalar_select 0, %s7, %s5
  $region1: #{tpu_custom_call.1} parent=0
    #allocation2 [shape = 'u8[151552]{0}', space=vmem, size = 0x25000, scoped, tag = 'input window, operand 2, single buffered']
    #allocation3 [shape = 's32[1]{0}', space=sflag, size = 0x4, scoped, tag = 'scoped memory for tpu_custom_call.1']
    #allocation4 [shape = 'u8[4096]{0}', space=vmem, size = 0x1000, scoped, tag = 'input window, operand 3, single buffered']
    #allocation5 [shape = 's32[1]{0}', space=sflag, size = 0x4, scoped, tag = 'scoped memory for tpu_custom_call.1']
    %9 = vsyncpa [#allocation3], 0
    %10 = vsyncpa [#allocation5], 0
    // Predicated region
    $region2: #{tpu_custom_call.1} parent=1 // pred_check
      _
    $region3: #{tpu_custom_call.1} parent=1 // pred_check_branch
      %12 = sbr.rel (0) target = $region5
    $region4: #{tpu_custom_call.1} parent=1 // pred_region
      _
    $region5: #{tpu_custom_call.1} parent=1 // pred_fallthru
      _
    // Predicated region
    $region6: #{tpu_custom_call.1} parent=1 // pred_check
      _
    $region7: #{tpu_custom_call.1} parent=1 // pred_check_branch
      %14 = sbr.rel (0) target = $region9
    $region8: #{tpu_custom_call.1} parent=1 // pred_region
      _
    $region9: #{tpu_custom_call.1} parent=1 // pred_fallthru
      _
    // Predicated region
    $region10: #{tpu_custom_call.1} parent=1 // pred_check
      _
    $region11: #{tpu_custom_call.1} parent=1 // pred_check_branch
      %16 = sbr.rel (0) target = $region13
    $region12: #{tpu_custom_call.1} parent=1 // pred_region
      %s18 = ssub.s32 4736, 4736
      %19 = vsyncadd [#allocation3], %s18
      %s20 = sshll.u32 [#allocation2], 4
      %s21 = int_to_ptr.vmem [resolvable:$true] %s20
      %26 = dma.hbm_to_vmem [thread:$0]  %s2, 4736, %s21, [#allocation3], 128, 128, 8
    $region13: #{tpu_custom_call.1} parent=1 // pred_fallthru
      _
    // Predicated region
    $region14: #{tpu_custom_call.1} parent=1 // pred_check
      _
    $region15: #{tpu_custom_call.1} parent=1 // pred_check_branch
      %28 = sbr.rel (0) target = $region17
    $region16: #{tpu_custom_call.1} parent=1 // pred_region
      %s30 = ssub.s32 128, 128
      %31 = vsyncadd [#allocation5], %s30
      %s33 = sshll.u32 [#allocation4], 4
      %s34 = int_to_ptr.vmem [resolvable:$true] %s33
      %36 = dma.hbm_to_vmem [thread:$0]  %s3, 128, %s34, [#allocation5]
    $region17: #{tpu_custom_call.1} parent=1 // pred_fallthru
      _
    // Predicated region
    $region18: #{tpu_custom_call.1} parent=1 // pred_check
      _
    $region19: #{tpu_custom_call.1} parent=1 // pred_check_branch
      %38 = sbr.rel (0) target = $region21
    $region20: #{tpu_custom_call.1} parent=1 // pred_region
      %39 = dma.done [#allocation3], 4736
    $region21: #{tpu_custom_call.1} parent=1 // pred_fallthru
      _
    // Predicated region
    $region22: #{tpu_custom_call.1} parent=1 // pred_check
      _
    $region23: #{tpu_custom_call.1} parent=1 // pred_check_branch
      %41 = sbr.rel (0) target = $region25
    $region24: #{tpu_custom_call.1} parent=1 // pred_region
      %42 = dma.done [#allocation5], 128
    $region25: #{tpu_custom_call.1} parent=1 // pred_fallthru
      _
    %v43 = vld [vmem:[#allocation4] sm:$0xff]
    %v44 = vld [vmem:[%s0] sm:$0xff]
    %v45 = vld [vmem:[%s1] sm:$0xff]
    %v46 = vld [vmem:[#allocation2] sm:$0xff]
    %v47 = vld [vmem:[#allocation2 + $0x8] sm:$0xff]
    %v48 = vld [vmem:[#allocation2 + $0x10] sm:$0xff]
    %v49 = vlaneseq
    %v50 = vshrl.u32 %v49, 7
    %v51 = vsub.s32 0, %v50
    %v52 = vrot.slane %v43, %v51
    %vm53 = vcmask 195584
    %v55 = vsel %vm53, %v44, 0
    %57 = vmatprep.subr.mxu0 0.0
    %58 = vmatpush1.msra.mxu0 0.0
    %59 = vmatprep.subr.mxu0 0.0
    %60 = vmatpush1.msra.mxu0 0.0
    %61 = vmatprep.subr.mxu0 0.0
    %62 = vmatpush1.msra.mxu0 0.0
    %63 = vmatprep.subr.mxu0 0.0
    %64 = vmatpush1.msra.mxu0 0.0
    %65 = vmatprep.subr.mxu0 0.0
    %66 = vmatpush1.msra.mxu0 0.0
    %67 = vmatprep.subr.mxu0 0.0
    %68 = vmatpush1.msra.mxu0 0.0
    %69 = vmatprep.subr.mxu0 0.0
    %70 = vmatpush1.msra.mxu0 0.0
    %71 = vmatprep.subr.mxu0 0.0
    %72 = vmatpush1.msra.mxu0 0.0
    %73 = vmatprep.subr.mxu0 0.0
    %74 = vmatpush1.msra.mxu0 0.0
    %75 = vmatprep.subr.mxu0 0.0
    %76 = vmatpush1.msra.mxu0 0.0
    %77 = vmatprep.subr.mxu0 0.0
    %78 = vmatpush1.msra.mxu0 0.0
    %79 = vmatprep.subr.mxu0 0.0
    %80 = vmatpush1.msra.mxu0 0.0
    %81 = vmatprep.subr.mxu0 0.0
    %82 = vmatpush1.msra.mxu0 0.0
    %83 = vmatprep.subr.mxu0 0.0
    %84 = vmatpush1.msra.mxu0 %v48
    %85 = vmatprep.subr.mxu0 0.0
    %86 = vmatpush1.msra.mxu0 %v47
    %87 = vmatprep.subr.mxu0 0.0
    %88 = vmatpush1.msra.mxu0 %v46
    %89 = vmatprep.subr.mxu0 0.0
    %90 = vmatpush2.msra.mxu0 0.0
    %91 = vmatprep.subr.mxu0 0.0
    %92 = vmatpush2.msra.mxu0 0.0
    %93 = vmatprep.subr.mxu0 0.0
    %94 = vmatpush2.msra.mxu0 0.0
    %95 = vmatprep.subr.mxu0 0.0
    %96 = vmatpush2.msra.mxu0 0.0
    %97 = vmatprep.subr.mxu0 0.0
    %98 = vmatpush2.msra.mxu0 0.0
    %99 = vmatprep.subr.mxu0 0.0
    %100 = vmatpush2.msra.mxu0 0.0
    %101 = vmatprep.subr.mxu0 0.0
    %102 = vmatpush2.msra.mxu0 0.0
    %103 = vmatprep.subr.mxu0 0.0
    %104 = vmatpush2.msra.mxu0 0.0
    %105 = vmatprep.subr.mxu0 0.0
    %106 = vmatpush2.msra.mxu0 0.0
    %107 = vmatprep.subr.mxu0 0.0
    %108 = vmatpush2.msra.mxu0 0.0
    %109 = vmatprep.subr.mxu0 0.0
    %110 = vmatpush2.msra.mxu0 0.0
    %111 = vmatprep.subr.mxu0 0.0
    %112 = vmatpush2.msra.mxu0 0.0
    %113 = vmatprep.subr.mxu0 0.0
    %114 = vmatpush2.msra.mxu0 0.0
    %115 = vmatprep.subr.mxu0 0.0
    %116 = vmatpush2.msra.mxu0 0.0
    %117 = vmatprep.subr.mxu0 0.0
    %118 = vmatpush2.msra.mxu0 0.0
    %119 = vmatprep.subr.mxu0 0.0
    %120 = vmatpush2.msra.mxu0 0.0
    %121 = vmatprep.mubr.f32.mxu0 0.0
    %122 = vmatmul.mubr.f32.gmra.mxu0 %v55
    %v123 = vpop.f32.mrf.mxu0
    %v124 = vadd.f32 %v52, %v123
    %v125 = vpop.f32.mrf.mxu0
    %126 = vdwg.mxu0
    %v127 = vmax.f32 %v124, 0.0
    %v128 = vld [vmem:[#allocation2 + $0x18] sm:$0xff]
    %v129 = vld [vmem:[#allocation2 + $0x20] sm:$0xff]
    %v130 = vld [vmem:[#allocation2 + $0x28] sm:$0xff]
    %v131 = vld [vmem:[#allocation2 + $0x30] sm:$0xff]
    %v132 = vld [vmem:[#allocation2 + $0x38] sm:$0xff]
    %v133 = vld [vmem:[#allocation2 + $0x40] sm:$0xff]
    %v134 = vld [vmem:[#allocation2 + $0x48] sm:$0xff]
    %v135 = vld [vmem:[#allocation2 + $0x50] sm:$0xff]
    %v136 = vld [vmem:[#allocation2 + $0x58] sm:$0xff]
    %v137 = vld [vmem:[#allocation2 + $0x60] sm:$0xff]
    %v138 = vld [vmem:[#allocation2 + $0x68] sm:$0xff]
    %v139 = vld [vmem:[#allocation2 + $0x70] sm:$0xff]
    %v140 = vld [vmem:[#allocation2 + $0x78] sm:$0xff]
    %v141 = vld [vmem:[#allocation2 + $0x80] sm:$0xff]
    %v142 = vld [vmem:[#allocation2 + $0x88] sm:$0xff]
    %v143 = vld [vmem:[#allocation2 + $0x90] sm:$0xff]
    %v144 = vlaneseq
    %v145 = vshrl.u32 %v144, 7
    %v146 = vsub.s32 1, %v145
    %v147 = vrot.slane %v43, %v146
    %148 = vmatprep.subr.mxu0 0.0
    %149 = vmatpush1.msra.mxu0 %v143
    %150 = vmatprep.subr.mxu0 0.0
    %151 = vmatpush1.msra.mxu0 %v142
    %152 = vmatprep.subr.mxu0 0.0
    %153 = vmatpush1.msra.mxu0 %v141
    %154 = vmatprep.subr.mxu0 0.0
    %155 = vmatpush1.msra.mxu0 %v140
    %156 = vmatprep.subr.mxu0 0.0
    %157 = vmatpush1.msra.mxu0 %v139
    %158 = vmatprep.subr.mxu0 0.0
    %159 = vmatpush1.msra.mxu0 %v138
    %160 = vmatprep.subr.mxu0 0.0
    %161 = vmatpush1.msra.mxu0 %v137
    %162 = vmatprep.subr.mxu0 0.0
    %163 = vmatpush1.msra.mxu0 %v136
    %164 = vmatprep.subr.mxu0 0.0
    %165 = vmatpush1.msra.mxu0 %v135
    %166 = vmatprep.subr.mxu0 0.0
    %167 = vmatpush1.msra.mxu0 %v134
    %168 = vmatprep.subr.mxu0 0.0
    %169 = vmatpush1.msra.mxu0 %v133
    %170 = vmatprep.subr.mxu0 0.0
    %171 = vmatpush1.msra.mxu0 %v132
    %172 = vmatprep.subr.mxu0 0.0
    %173 = vmatpush1.msra.mxu0 %v131
    %174 = vmatprep.subr.mxu0 0.0
    %175 = vmatpush1.msra.mxu0 %v130
    %176 = vmatprep.subr.mxu0 0.0
    %177 = vmatpush1.msra.mxu0 %v129
    %178 = vmatprep.subr.mxu0 0.0
    %179 = vmatpush1.msra.mxu0 %v128
    %180 = vmatprep.subr.mxu0 0.0
    %181 = vmatpush2.msra.mxu0 0.0
    %182 = vmatprep.subr.mxu0 0.0
    %183 = vmatpush2.msra.mxu0 0.0
    %184 = vmatprep.subr.mxu0 0.0
    %185 = vmatpush2.msra.mxu0 0.0
    %186 = vmatprep.subr.mxu0 0.0
    %187 = vmatpush2.msra.mxu0 0.0
    %188 = vmatprep.subr.mxu0 0.0
    %189 = vmatpush2.msra.mxu0 0.0
    %190 = vmatprep.subr.mxu0 0.0
    %191 = vmatpush2.msra.mxu0 0.0
    %192 = vmatprep.subr.mxu0 0.0
    %193 = vmatpush2.msra.mxu0 0.0
    %194 = vmatprep.subr.mxu0 0.0
    %195 = vmatpush2.msra.mxu0 0.0
    %196 = vmatprep.subr.mxu0 0.0
    %197 = vmatpush2.msra.mxu0 0.0
    %198 = vmatprep.subr.mxu0 0.0
    %199 = vmatpush2.msra.mxu0 0.0
    %200 = vmatprep.subr.mxu0 0.0
    %201 = vmatpush2.msra.mxu0 0.0
    %202 = vmatprep.subr.mxu0 0.0
    %203 = vmatpush2.msra.mxu0 0.0
    %204 = vmatprep.subr.mxu0 0.0
    %205 = vmatpush2.msra.mxu0 0.0
    %206 = vmatprep.subr.mxu0 0.0
    %207 = vmatpush2.msra.mxu0 0.0
    %208 = vmatprep.subr.mxu0 0.0
    %209 = vmatpush2.msra.mxu0 0.0
    %210 = vmatprep.subr.mxu0 0.0
    %211 = vmatpush2.msra.mxu0 0.0
    %212 = vmatprep.mubr.f32.mxu0 0.0
    %213 = vmatmul.mubr.f32.gmra.mxu0 %v127
    %v214 = vpop.f32.mrf.mxu0
    %v215 = vadd.f32 %v147, %v214
    %v216 = vpop.f32.mrf.mxu0
    %217 = vdwg.mxu0
    %v218 = vld [vmem:[#allocation2 + $0x98] sm:$0xff]
    %220 = vset.pattern.permute.xlu0 0
    %221 = vperm.xlu0 %220, %v45
    %v222 = vpop.permute.xlu0 %221
    %v224 = vlaneseq
    %v225 = vshrl.u32 %v224, 7
    %v226 = vsub.s32 0, %v225
    %v227 = vrot.slane %v218, %v226
    %v228 = vmul.f32 %v222, %v227
    %v229 = vadd.f32 %v215, %v228
    %230 = vset.pattern.permute.xlu0 1
    %231 = vperm.xlu0 %230, %v45
    %v232 = vpop.permute.xlu0 %231
    %v234 = vlaneseq
    %v235 = vshrl.u32 %v234, 7
    %v236 = vsub.s32 1, %v235
    %v237 = vrot.slane %v218, %v236
    %v238 = vmul.f32 %v232, %v237
    %v239 = vadd.f32 %v229, %v238
    %v240 = vmax.f32 %v239, 0.0
    %v241 = vld [vmem:[#allocation2 + $0xa0] sm:$0xff]
    %v242 = vld [vmem:[#allocation2 + $0xa8] sm:$0xff]
    %v243 = vld [vmem:[#allocation2 + $0xb0] sm:$0xff]
    %v244 = vld [vmem:[#allocation2 + $0xb8] sm:$0xff]
    %v245 = vld [vmem:[#allocation2 + $0xc0] sm:$0xff]
    %v246 = vld [vmem:[#allocation2 + $0xc8] sm:$0xff]
    %v247 = vld [vmem:[#allocation2 + $0xd0] sm:$0xff]
    %v248 = vld [vmem:[#allocation2 + $0xd8] sm:$0xff]
    %v249 = vld [vmem:[#allocation2 + $0xe0] sm:$0xff]
    %v250 = vld [vmem:[#allocation2 + $0xe8] sm:$0xff]
    %v251 = vld [vmem:[#allocation2 + $0xf0] sm:$0xff]
    %v252 = vld [vmem:[#allocation2 + $0xf8] sm:$0xff]
    %v253 = vld [vmem:[#allocation2 + $0x100] sm:$0xff]
    %v254 = vld [vmem:[#allocation2 + $0x108] sm:$0xff]
    %v255 = vld [vmem:[#allocation2 + $0x110] sm:$0xff]
    %v256 = vld [vmem:[#allocation2 + $0x118] sm:$0xff]
    %v257 = vlaneseq
    %v258 = vshrl.u32 %v257, 7
    %v259 = vsub.s32 2, %v258
    %v260 = vrot.slane %v43, %v259
    %261 = vmatprep.subr.mxu0 0.0
    %262 = vmatpush1.msra.mxu0 %v256
    %263 = vmatprep.subr.mxu0 0.0
    %264 = vmatpush1.msra.mxu0 %v255
    %265 = vmatprep.subr.mxu0 0.0
    %266 = vmatpush1.msra.mxu0 %v254
    %267 = vmatprep.subr.mxu0 0.0
    %268 = vmatpush1.msra.mxu0 %v253
    %269 = vmatprep.subr.mxu0 0.0
    %270 = vmatpush1.msra.mxu0 %v252
    %271 = vmatprep.subr.mxu0 0.0
    %272 = vmatpush1.msra.mxu0 %v251
    %273 = vmatprep.subr.mxu0 0.0
    %274 = vmatpush1.msra.mxu0 %v250
    %275 = vmatprep.subr.mxu0 0.0
    %276 = vmatpush1.msra.mxu0 %v249
    %277 = vmatprep.subr.mxu0 0.0
    %278 = vmatpush1.msra.mxu0 %v248
    %279 = vmatprep.subr.mxu0 0.0
    %280 = vmatpush1.msra.mxu0 %v247
    %281 = vmatprep.subr.mxu0 0.0
    %282 = vmatpush1.msra.mxu0 %v246
    %283 = vmatprep.subr.mxu0 0.0
    %284 = vmatpush1.msra.mxu0 %v245
    %285 = vmatprep.subr.mxu0 0.0
    %286 = vmatpush1.msra.mxu0 %v244
    %287 = vmatprep.subr.mxu0 0.0
    %288 = vmatpush1.msra.mxu0 %v243
    %289 = vmatprep.subr.mxu0 0.0
    %290 = vmatpush1.msra.mxu0 %v242
    %291 = vmatprep.subr.mxu0 0.0
    %292 = vmatpush1.msra.mxu0 %v241
    %293 = vmatprep.subr.mxu0 0.0
    %294 = vmatpush2.msra.mxu0 0.0
    %295 = vmatprep.subr.mxu0 0.0
    %296 = vmatpush2.msra.mxu0 0.0
    %297 = vmatprep.subr.mxu0 0.0
    %298 = vmatpush2.msra.mxu0 0.0
    %299 = vmatprep.subr.mxu0 0.0
    %300 = vmatpush2.msra.mxu0 0.0
    %301 = vmatprep.subr.mxu0 0.0
    %302 = vmatpush2.msra.mxu0 0.0
    %303 = vmatprep.subr.mxu0 0.0
    %304 = vmatpush2.msra.mxu0 0.0
    %305 = vmatprep.subr.mxu0 0.0
    %306 = vmatpush2.msra.mxu0 0.0
    %307 = vmatprep.subr.mxu0 0.0
    %308 = vmatpush2.msra.mxu0 0.0
    %309 = vmatprep.subr.mxu0 0.0
    %310 = vmatpush2.msra.mxu0 0.0
    %311 = vmatprep.subr.mxu0 0.0
    %312 = vmatpush2.msra.mxu0 0.0
    %313 = vmatprep.subr.mxu0 0.0
    %314 = vmatpush2.msra.mxu0 0.0
    %315 = vmatprep.subr.mxu0 0.0
    %316 = vmatpush2.msra.mxu0 0.0
    %317 = vmatprep.subr.mxu0 0.0
    %318 = vmatpush2.msra.mxu0 0.0
    %319 = vmatprep.subr.mxu0 0.0
    %320 = vmatpush2.msra.mxu0 0.0
    %321 = vmatprep.subr.mxu0 0.0
    %322 = vmatpush2.msra.mxu0 0.0
    %323 = vmatprep.subr.mxu0 0.0
    %324 = vmatpush2.msra.mxu0 0.0
    %325 = vmatprep.mubr.f32.mxu0 0.0
    %326 = vmatmul.mubr.f32.gmra.mxu0 %v240
    %v327 = vpop.f32.mrf.mxu0
    %v328 = vadd.f32 %v260, %v327
    %v329 = vpop.f32.mrf.mxu0
    %330 = vdwg.mxu0
    %v331 = vmax.f32 %v328, 0.0
    %v332 = vld [vmem:[#allocation2 + $0x120] sm:$0xff]
    %v333 = vlaneseq
    %v334 = vshrl.u32 %v333, 7
    %v335 = vsub.s32 0, %v334
    %v336 = vrot.slane %v332, %v335
    %v337 = vmul.f32 %v331, %v336
    %338 = vadd.xlane.f32.xlu0 %v337
    %v339 = vpop.xlane.xlu0 %338
    %v340 = vlaneseq
    %v341 = vshrl.u32 %v340, 7
    %v342 = vsub.s32 3, %v341
    %v343 = vrot.slane %v43, %v342
    %v344 = vadd.f32 %v339, %v343
    %vm345 = vcmask 7168
    %346 = vst.msk [vmem:[%s4] sm:$0xff] %vm345, %v344
    // Predicated region
    $region26: #{tpu_custom_call.1} parent=1 // pred_check
      _
    $region27: #{tpu_custom_call.1} parent=1 // pred_check_branch
      %348 = sbr.rel (0) target = $region29
    $region28: #{tpu_custom_call.1} parent=1 // pred_region
      _
    $region29: #{tpu_custom_call.1} parent=1 // pred_fallthru
      _
    // Predicated region
    $region30: #{tpu_custom_call.1} parent=1 // pred_check
      _
    $region31: #{tpu_custom_call.1} parent=1 // pred_check_branch
      %350 = sbr.rel (0) target = $region33
    $region32: #{tpu_custom_call.1} parent=1 // pred_region
      _
    $region33: #{tpu_custom_call.1} parent=1 // pred_fallthru
      _
    %351 = vsyncpa [#allocation3], 1
    %352 = vsyncpa [#allocation5], 1

</llo_original>
